<compile_context>
chip_gen: v7x
topology: tpu7x:2x2x1
jax: 0.10.0
libtpu: 0.0.40
codegen_flags: <defaults>
</compile_context>

<pallas_src>
import jax
import jax.numpy as jnp
from jax.experimental import pallas as pl
from jax.experimental.pallas import tpu as pltpu

# (out_features, in_features) per layer, PyTorch nn.Linear convention.
_LAYER_DIMS = ((10, 10), (8, 10), (8, 8), (8, 4)[::-1], (1, 4))  # placeholder fixed below
_LAYER_DIMS = ((10, 10), (8, 10), (8, 8), (4, 8), (1, 4))
_PAD = 16           # every layer's in/out feature dim is zero-padded to 16
_NUM_LAYERS = len(_LAYER_DIMS)
_MAX_TILE_B = 1024  # batch (lane) tile: multiple of 128, tiny VMEM footprint


def _round_up(x, m):
    return (x + m - 1) // m * m


def _mlp_kernel(x_ref, w_ref, b_ref, out_ref):
    """x_ref: (16, TB) transposed/padded inputs; w_ref: (80, 16) packed weights;
    b_ref: (80, 1) packed biases; out_ref: (1, TB) sigmoid outputs."""
    h = x_ref[...]                                               # (16, TB)
    for layer in range(_NUM_LAYERS - 1):
        w = w_ref[layer * _PAD:(layer + 1) * _PAD, :]            # (16, 16) zero-padded
        b = b_ref[layer * _PAD:(layer + 1) * _PAD, :]            # (16, 1)  zero-padded
        h = jnp.dot(w, h, preferred_element_type=jnp.float32) + b
        h = jnp.maximum(h, 0.0)                                  # ReLU; padded rows stay 0

    last = _NUM_LAYERS - 1
    w = w_ref[last * _PAD:(last + 1) * _PAD, :]
    b = b_ref[last * _PAD:(last + 1) * _PAD, :]
    z = jnp.dot(w, h, preferred_element_type=jnp.float32) + b    # (16, TB); row 0 = logit
    z0 = z[:1, :]                                                # (1, TB)
    # sigmoid via EUP exp + reciprocal (no VALU divide)
    out_ref[...] = pl.reciprocal(1.0 + jnp.exp(-z0), approx=False)


def _pack_params(params):
    """Zero-pad each (out, in) weight to (16, 16) and each (out,) bias to
    (16, 1), stacking to a (80, 16) weight slab and a (80, 1) bias slab."""
    w_blocks, b_blocks = [], []
    for (w, b), (dout, din) in zip(params, _LAYER_DIMS):
        wp = jnp.zeros((_PAD, _PAD), jnp.float32).at[:dout, :din].set(w)
        bp = jnp.zeros((_PAD, 1), jnp.float32).at[:dout, 0].set(b)
        w_blocks.append(wp)
        b_blocks.append(bp)
    return jnp.concatenate(w_blocks, axis=0), jnp.concatenate(b_blocks, axis=0)


@jax.jit
def binary_classification_nn(x, params):
    """x: (batch, 10) f32; params: list of (W (out,in), b (out,)) PyTorch-style.
    Returns (batch, 1) f32 sigmoid outputs."""
    batch, in_dim = x.shape
    assert in_dim == _LAYER_DIMS[0][1]

    w_all, b_all = _pack_params(params)

    tile_b = min(_MAX_TILE_B, _round_up(batch, 128))
    b_pad = _round_up(batch, tile_b)
    grid = (b_pad // tile_b,)

    # Transpose to (features, batch): batch on the 128-lane axis; pad the
    # feature dim 10 -> 16 and the batch dim -> b_pad with zeros.
    xt = jnp.zeros((_PAD, b_pad), jnp.float32).at[:in_dim, :batch].set(x.T)

    out = pl.pallas_call(
        _mlp_kernel,
        out_shape=jax.ShapeDtypeStruct((1, b_pad), jnp.float32),
        grid=grid,
        in_specs=[
            pl.BlockSpec((_PAD, tile_b), lambda i: (0, i)),    # x marches over batch
            pl.BlockSpec(w_all.shape, lambda i: (0, 0)),       # weights VMEM-resident
            pl.BlockSpec(b_all.shape, lambda i: (0, 0)),       # biases  VMEM-resident
        ],
        out_specs=pl.BlockSpec((1, tile_b), lambda i: (0, i)),  # lane-dense store
        compiler_params=pltpu.CompilerParams(
            dimension_semantics=("parallel",)),                 # megacore split on v7x
    )(xt, w_all, b_all)

    return out[0, :batch][:, None]                              # (batch, 1)


def init_params(key):
    """PyTorch nn.Linear default init: U(-1/sqrt(fan_in), +1/sqrt(fan_in))."""
    params = []
    for (dout, din) in _LAYER_DIMS:
        key, kw, kb = jax.random.split(key, 3)
        bound = 1.0 / jnp.sqrt(jnp.float32(din))
        w = jax.random.uniform(kw, (dout, din), jnp.float32, -bound, bound)
        b = jax.random.uniform(kb, (dout,), jnp.float32, -bound, bound)
        params.append((w, b))
    return params


def reference_forward(x, params):
    h = x
    for i, (w, b) in enumerate(params):
        h = h @ w.T + b
        h = jnp.maximum(h, 0.0) if i < len(params) - 1 else jax.nn.sigmoid(h)
    return h


if __name__ == "__main__":
    key = jax.random.PRNGKey(0)
    key, kx_small, kx_large = jax.random.split(key, 3)
    params = init_params(key)

    # Small batch (pads to one 128-lane tile) and a larger batch that exercises
    # multiple pipelined grid steps (tile_b = 1024, grid = (3,)).
    for batch, kx in ((8, kx_small), (2500, kx_large)):
        x = jax.random.normal(kx, (batch, 10), jnp.float32)
        out = jax.block_until_ready(binary_classification_nn(x, params))
        ref = reference_forward(x, params)
        assert out.shape == (batch, 1), out.shape
        assert jnp.allclose(out, ref, atol=1e-4, rtol=1e-4), \
            float(jnp.max(jnp.abs(out - ref)))

    print("KERNEL_OK")
</pallas_src>

<mosaic_0001>
module attributes {stable_mosaic.version = 11 : i64} {
  func.func @_mlp_kernel(%arg0: i32, %arg1: memref<16x128xf32, #tpu.memory_space<vmem>>, %arg2: memref<80x16xf32, #tpu.memory_space<vmem>>, %arg3: memref<80x1xf32, #tpu.memory_space<vmem>>, %arg4: memref<1x128xf32, #tpu.memory_space<vmem>>) attributes {dimension_semantics = [#tpu.dimension_semantics<parallel>], iteration_bounds = array<i64: 1>, scalar_prefetch = 0 : i64, scratch_operands = 0 : i64, tpu.core_type = #tpu.core_type<tc>, window_params = [{transform_indices = @transform_0, window_bounds = array<i64: 16, 128>}, {pipeline_mode = #tpu.pipeline_mode<synchronous>, transform_indices = @transform_1, window_bounds = array<i64: 80, 16>}, {pipeline_mode = #tpu.pipeline_mode<synchronous>, transform_indices = @transform_2, window_bounds = array<i64: 80, 1>}, {transform_indices = @transform_3, window_bounds = array<i64: 1, 128>}]} {
    %c0 = arith.constant 0 : index
    %c0_0 = arith.constant 0 : index
    %0 = vector.load %arg1[%c0, %c0_0] : memref<16x128xf32, #tpu.memory_space<vmem>>, vector<16x128xf32>
    %c0_1 = arith.constant 0 : index
    %c0_2 = arith.constant 0 : index
    %1 = vector.load %arg2[%c0_1, %c0_2] : memref<80x16xf32, #tpu.memory_space<vmem>>, vector<16x16xf32>
    %c0_3 = arith.constant 0 : index
    %c0_4 = arith.constant 0 : index
    %2 = vector.load %arg3[%c0_3, %c0_4] : memref<80x1xf32, #tpu.memory_space<vmem>>, vector<16x1xf32>
    %cst = arith.constant dense<0.000000e+00> : vector<16x128xf32>
    %3 = tpu.matmul %1, %0, %cst {dimension_numbers = #tpu.dot_dimension_numbers<[1], [0], [0], [1], [0, 0, 1, 1], [], []>} : vector<16x16xf32>, vector<16x128xf32>, vector<16x128xf32> -> vector<16x128xf32>
    %4 = vector.broadcast %2 : vector<16x1xf32> to vector<16x128xf32>
    %5 = arith.addf %3, %4 : vector<16x128xf32>
    %cst_5 = arith.constant 0.000000e+00 : f32
    %6 = vector.broadcast %cst_5 : f32 to vector<16x128xf32>
    %7 = arith.maximumf %5, %6 : vector<16x128xf32>
    %c16 = arith.constant 16 : index
    %c0_6 = arith.constant 0 : index
    %8 = vector.load %arg2[%c16, %c0_6] : memref<80x16xf32, #tpu.memory_space<vmem>>, vector<16x16xf32>
    %c16_7 = arith.constant 16 : index
    %c0_8 = arith.constant 0 : index
    %9 = vector.load %arg3[%c16_7, %c0_8] : memref<80x1xf32, #tpu.memory_space<vmem>>, vector<16x1xf32>
    %cst_9 = arith.constant dense<0.000000e+00> : vector<16x128xf32>
    %10 = tpu.matmul %8, %7, %cst_9 {dimension_numbers = #tpu.dot_dimension_numbers<[1], [0], [0], [1], [0, 0, 1, 1], [], []>} : vector<16x16xf32>, vector<16x128xf32>, vector<16x128xf32> -> vector<16x128xf32>
    %11 = vector.broadcast %9 : vector<16x1xf32> to vector<16x128xf32>
    %12 = arith.addf %10, %11 : vector<16x128xf32>
    %cst_10 = arith.constant 0.000000e+00 : f32
    %13 = vector.broadcast %cst_10 : f32 to vector<16x128xf32>
    %14 = arith.maximumf %12, %13 : vector<16x128xf32>
    %c32 = arith.constant 32 : index
    %c0_11 = arith.constant 0 : index
    %15 = vector.load %arg2[%c32, %c0_11] : memref<80x16xf32, #tpu.memory_space<vmem>>, vector<16x16xf32>
    %c32_12 = arith.constant 32 : index
    %c0_13 = arith.constant 0 : index
    %16 = vector.load %arg3[%c32_12, %c0_13] : memref<80x1xf32, #tpu.memory_space<vmem>>, vector<16x1xf32>
    %cst_14 = arith.constant dense<0.000000e+00> : vector<16x128xf32>
    %17 = tpu.matmul %15, %14, %cst_14 {dimension_numbers = #tpu.dot_dimension_numbers<[1], [0], [0], [1], [0, 0, 1, 1], [], []>} : vector<16x16xf32>, vector<16x128xf32>, vector<16x128xf32> -> vector<16x128xf32>
    %18 = vector.broadcast %16 : vector<16x1xf32> to vector<16x128xf32>
    %19 = arith.addf %17, %18 : vector<16x128xf32>
    %cst_15 = arith.constant 0.000000e+00 : f32
    %20 = vector.broadcast %cst_15 : f32 to vector<16x128xf32>
    %21 = arith.maximumf %19, %20 : vector<16x128xf32>
    %c48 = arith.constant 48 : index
    %c0_16 = arith.constant 0 : index
    %22 = vector.load %arg2[%c48, %c0_16] : memref<80x16xf32, #tpu.memory_space<vmem>>, vector<16x16xf32>
    %c48_17 = arith.constant 48 : index
    %c0_18 = arith.constant 0 : index
    %23 = vector.load %arg3[%c48_17, %c0_18] : memref<80x1xf32, #tpu.memory_space<vmem>>, vector<16x1xf32>
    %cst_19 = arith.constant dense<0.000000e+00> : vector<16x128xf32>
    %24 = tpu.matmul %22, %21, %cst_19 {dimension_numbers = #tpu.dot_dimension_numbers<[1], [0], [0], [1], [0, 0, 1, 1], [], []>} : vector<16x16xf32>, vector<16x128xf32>, vector<16x128xf32> -> vector<16x128xf32>
    %25 = vector.broadcast %23 : vector<16x1xf32> to vector<16x128xf32>
    %26 = arith.addf %24, %25 : vector<16x128xf32>
    %cst_20 = arith.constant 0.000000e+00 : f32
    %27 = vector.broadcast %cst_20 : f32 to vector<16x128xf32>
    %28 = arith.maximumf %26, %27 : vector<16x128xf32>
    %c64 = arith.constant 64 : index
    %c0_21 = arith.constant 0 : index
    %29 = vector.load %arg2[%c64, %c0_21] : memref<80x16xf32, #tpu.memory_space<vmem>>, vector<16x16xf32>
    %c64_22 = arith.constant 64 : index
    %c0_23 = arith.constant 0 : index
    %30 = vector.load %arg3[%c64_22, %c0_23] : memref<80x1xf32, #tpu.memory_space<vmem>>, vector<16x1xf32>
    %cst_24 = arith.constant dense<0.000000e+00> : vector<16x128xf32>
    %31 = tpu.matmul %29, %28, %cst_24 {dimension_numbers = #tpu.dot_dimension_numbers<[1], [0], [0], [1], [0, 0, 1, 1], [], []>} : vector<16x16xf32>, vector<16x128xf32>, vector<16x128xf32> -> vector<16x128xf32>
    %32 = vector.broadcast %30 : vector<16x1xf32> to vector<16x128xf32>
    %33 = arith.addf %31, %32 : vector<16x128xf32>
    %34 = vector.extract_strided_slice %33 {offsets = [0, 0], sizes = [1, 128], strides = [1, 1]} : vector<16x128xf32> to vector<1x128xf32>
    %cst_25 = arith.constant 0.000000e+00 : f32
    %35 = vector.broadcast %cst_25 : f32 to vector<1x128xf32>
    %36 = arith.subf %35, %34 : vector<1x128xf32>
    %37 = math.exp %36 : vector<1x128xf32>
    %cst_26 = arith.constant 1.000000e+00 : f32
    %38 = vector.broadcast %cst_26 : f32 to vector<1x128xf32>
    %39 = arith.addf %38, %37 : vector<1x128xf32>
    %40 = tpu.reciprocal %39 : vector<1x128xf32> -> vector<1x128xf32>
    %c0_27 = arith.constant 0 : index
    %c0_28 = arith.constant 0 : index
    %41 = vector.load %arg4[%c0_27, %c0_28] : memref<1x128xf32, #tpu.memory_space<vmem>>, vector<1x128xf32>
    tpu.vector_store %arg4[%c0_27, %c0_28], %40 {strides = array<i32>} : memref<1x128xf32, #tpu.memory_space<vmem>>, vector<1x128xf32>,
    return
  }
  func.func @transform_0(%arg0: i32) -> (i32, i32) {
    %c0_i32 = arith.constant 0 : i32
    %c0_i32_0 = arith.constant 0 : i32
    return %c0_i32, %arg0 : i32, i32
  }
  func.func @transform_1(%arg0: i32) -> (i32, i32) {
    %c0_i32 = arith.constant 0 : i32
    %c0_i32_0 = arith.constant 0 : i32
    %c0_i32_1 = arith.constant 0 : i32
    return %c0_i32, %c0_i32_0 : i32, i32
  }
  func.func @transform_2(%arg0: i32) -> (i32, i32) {
    %c0_i32 = arith.constant 0 : i32
    %c0_i32_0 = arith.constant 0 : i32
    %c0_i32_1 = arith.constant 0 : i32
    return %c0_i32, %c0_i32_0 : i32, i32
  }
  func.func @transform_3(%arg0: i32) -> (i32, i32) {
    %c0_i32 = arith.constant 0 : i32
    %c0_i32_0 = arith.constant 0 : i32
    return %c0_i32, %arg0 : i32, i32
  }
}

</mosaic_0001>

<llo_original>
// kernel: binary_classification_nn.1
$region0: #{binary_classification_nn.1}
  #allocation0 [shape = 'u32[]', space=smem, size = 0x4, offset = 0x4, fixed_abs, tag = 'smem constant byte address 0x4 - core index']
  #allocation1 [shape = 'u32[144,128]{1,0:T(1,128)}', space=vmem, size = 0x12000, scoped, tag = 'internal scratch']
  %s0 = inlined_call_operand.vmem [shape: f32[16,128], index: 0, kind: input, shape index: {}]
  %s1 = inlined_call_operand.vmem [shape: f32[80,16], index: 1, kind: input, shape index: {}]
  %s2 = inlined_call_operand.vmem [shape: f32[80,1], index: 2, kind: input, shape index: {}]
  %s3 = inlined_call_operand.vmem [shape: f32[1,128], index: 3, kind: output, shape index: {}]
  %s4 = sld [smem:[#allocation0]]
  $region22: #{binary_classification_nn.1} parent=0
    _
  %s6 = ssub.s32 1, %s4
  %s7 = scalar_select 0, %s6, %s4
  // Predicated region
  $region2: #{binary_classification_nn.1} parent=0 // pred_check
    _
  $region3: #{binary_classification_nn.1} parent=0 // pred_check_branch
    %9 = sbr.rel (0) target = $region5
  $region4: #{binary_classification_nn.1} parent=0 // pred_region
    _
  $region5: #{binary_classification_nn.1} parent=0 // pred_fallthru
    _
  // Predicated region
  $region6: #{binary_classification_nn.1} parent=0 // pred_check
    _
  $region7: #{binary_classification_nn.1} parent=0 // pred_check_branch
    %11 = sbr.rel (0) target = $region9
  $region8: #{binary_classification_nn.1} parent=0 // pred_region
    _
  $region9: #{binary_classification_nn.1} parent=0 // pred_fallthru
    _
  // Predicated region
  $region10: #{binary_classification_nn.1} parent=0 // pred_check
    _
  $region11: #{binary_classification_nn.1} parent=0 // pred_check_branch
    %13 = sbr.rel (0) target = $region13
  $region12: #{binary_classification_nn.1} parent=0 // pred_region
    _
  $region13: #{binary_classification_nn.1} parent=0 // pred_fallthru
    _
  %v14 = vld [vmem:[%s0] sm:$0xff]
  %v15 = vld [vmem:[%s0 + $0x8] sm:$0xff]
  %v16 = vld [vmem:[%s1] sm:$0xff]
  %v17 = vld [vmem:[%s1 + $0x8] sm:$0xff]
  %v18 = vld [vmem:[%s2] sm:$0xff]
  %v19 = vld [vmem:[%s2 + $0x8] sm:$0xff]
  %21 = vset.pattern.permute.xlu0 0
  %22 = vperm.xlu0 %21, %v18
  %v23 = vpop.permute.xlu0 %22
  %26 = vset.pattern.permute.xlu0 0
  %27 = vperm.xlu0 %26, %v19
  %v28 = vpop.permute.xlu0 %27
  %vm30 = vcmask 130048
  %v32 = vsel %vm30, %v16, 0
  %v35 = vsel %vm30, %v17, 0
  %37 = vmatprep.subr.mxu0 0.0
  %38 = vmatpush1.msra.mxu0 %v14
  %39 = vmatprep.subr.mxu0 0.0
  %40 = vmatpush1.msra.mxu0 %v15
  %41 = vmatprep.subr.mxu0 0.0
  %42 = vmatpush1.msra.mxu0 0.0
  %43 = vmatprep.subr.mxu0 0.0
  %44 = vmatpush1.msra.mxu0 0.0
  %45 = vmatprep.subr.mxu0 0.0
  %46 = vmatpush1.msra.mxu0 0.0
  %47 = vmatprep.subr.mxu0 0.0
  %48 = vmatpush1.msra.mxu0 0.0
  %49 = vmatprep.subr.mxu0 0.0
  %50 = vmatpush1.msra.mxu0 0.0
  %51 = vmatprep.subr.mxu0 0.0
  %52 = vmatpush1.msra.mxu0 0.0
  %53 = vmatprep.subr.mxu0 0.0
  %54 = vmatpush1.msra.mxu0 0.0
  %55 = vmatprep.subr.mxu0 0.0
  %56 = vmatpush1.msra.mxu0 0.0
  %57 = vmatprep.subr.mxu0 0.0
  %58 = vmatpush1.msra.mxu0 0.0
  %59 = vmatprep.subr.mxu0 0.0
  %60 = vmatpush1.msra.mxu0 0.0
  %61 = vmatprep.subr.mxu0 0.0
  %62 = vmatpush1.msra.mxu0 0.0
  %63 = vmatprep.subr.mxu0 0.0
  %64 = vmatpush1.msra.mxu0 0.0
  %65 = vmatprep.subr.mxu0 0.0
  %66 = vmatpush1.msra.mxu0 0.0
  %67 = vmatprep.subr.mxu0 0.0
  %68 = vmatpush1.msra.mxu0 0.0
  %69 = vmatprep.subr.mxu0 0.0
  %70 = vmatpush1.msra.mxu0 0.0
  %71 = vmatprep.subr.mxu0 0.0
  %72 = vmatpush1.msra.mxu0 0.0
  %73 = vmatprep.subr.mxu0 0.0
  %74 = vmatpush1.msra.mxu0 0.0
  %75 = vmatprep.subr.mxu0 0.0
  %76 = vmatpush1.msra.mxu0 0.0
  %77 = vmatprep.subr.mxu0 0.0
  %78 = vmatpush1.msra.mxu0 0.0
  %79 = vmatprep.subr.mxu0 0.0
  %80 = vmatpush1.msra.mxu0 0.0
  %81 = vmatprep.subr.mxu0 0.0
  %82 = vmatpush1.msra.mxu0 0.0
  %83 = vmatprep.subr.mxu0 0.0
  %84 = vmatpush1.msra.mxu0 0.0
  %85 = vmatprep.subr.mxu0 0.0
  %86 = vmatpush1.msra.mxu0 0.0
  %87 = vmatprep.subr.mxu0 0.0
  %88 = vmatpush1.msra.mxu0 0.0
  %89 = vmatprep.subr.mxu0 0.0
  %90 = vmatpush1.msra.mxu0 0.0
  %91 = vmatprep.subr.mxu0 0.0
  %92 = vmatpush1.msra.mxu0 0.0
  %93 = vmatprep.subr.mxu0 0.0
  %94 = vmatpush1.msra.mxu0 0.0
  %95 = vmatprep.subr.mxu0 0.0
  %96 = vmatpush1.msra.mxu0 0.0
  %97 = vmatprep.subr.mxu0 0.0
  %98 = vmatpush1.msra.mxu0 0.0
  %99 = vmatprep.subr.mxu0 0.0
  %100 = vmatpush1.msra.mxu0 0.0
  %101 = vmatprep.mubr.f32.mxu0 0.0
  %102 = vmatmul.mubr.f32.gmra.mrb[0].mxu0 %v32
  %v103 = vpop.f32.mrb[0].mxu0
  %v104 = vadd.f32 %v23, %v103
  %v105 = vpop.f32.mrb[0].mxu0
  %106 = vmatprep.mubr.f32.mxu0 0.0
  %107 = vmatmul.mubr.f32.gmra.mrb[0].mxu0 %v35
  %v108 = vpop.f32.mrb[0].mxu0
  %v109 = vadd.f32 %v28, %v108
  %v110 = vpop.f32.mrb[0].mxu0
  %111 = vdwg.mxu0
  %v112 = vmax.f32 %v104, 0.0
  %v113 = vmax.f32 %v109, 0.0
  %v114 = vld [vmem:[%s1 + $0x10] sm:$0xff]
  %v115 = vld [vmem:[%s1 + $0x18] sm:$0xff]
  %v116 = vld [vmem:[%s2 + $0x10] sm:$0xff]
  %v117 = vld [vmem:[%s2 + $0x18] sm:$0xff]
  %119 = vset.pattern.permute.xlu0 0
  %120 = vperm.xlu0 %119, %v116
  %v121 = vpop.permute.xlu0 %120
  %124 = vset.pattern.permute.xlu0 0
  %125 = vperm.xlu0 %124, %v117
  %v126 = vpop.permute.xlu0 %125
  %v129 = vsel %vm30, %v114, 0
  %v132 = vsel %vm30, %v115, 0
  %134 = vmatprep.subr.mxu0 0.0
  %135 = vmatpush1.msra.mxu0 %v112
  %136 = vmatprep.subr.mxu0 0.0
  %137 = vmatpush1.msra.mxu0 %v113
  %138 = vmatprep.subr.mxu0 0.0
  %139 = vmatpush1.msra.mxu0 0.0
  %140 = vmatprep.subr.mxu0 0.0
  %141 = vmatpush1.msra.mxu0 0.0
  %142 = vmatprep.subr.mxu0 0.0
  %143 = vmatpush1.msra.mxu0 0.0
  %144 = vmatprep.subr.mxu0 0.0
  %145 = vmatpush1.msra.mxu0 0.0
  %146 = vmatprep.subr.mxu0 0.0
  %147 = vmatpush1.msra.mxu0 0.0
  %148 = vmatprep.subr.mxu0 0.0
  %149 = vmatpush1.msra.mxu0 0.0
  %150 = vmatprep.subr.mxu0 0.0
  %151 = vmatpush1.msra.mxu0 0.0
  %152 = vmatprep.subr.mxu0 0.0
  %153 = vmatpush1.msra.mxu0 0.0
  %154 = vmatprep.subr.mxu0 0.0
  %155 = vmatpush1.msra.mxu0 0.0
  %156 = vmatprep.subr.mxu0 0.0
  %157 = vmatpush1.msra.mxu0 0.0
  %158 = vmatprep.subr.mxu0 0.0
  %159 = vmatpush1.msra.mxu0 0.0
  %160 = vmatprep.subr.mxu0 0.0
  %161 = vmatpush1.msra.mxu0 0.0
  %162 = vmatprep.subr.mxu0 0.0
  %163 = vmatpush1.msra.mxu0 0.0
  %164 = vmatprep.subr.mxu0 0.0
  %165 = vmatpush1.msra.mxu0 0.0
  %166 = vmatprep.subr.mxu0 0.0
  %167 = vmatpush1.msra.mxu0 0.0
  %168 = vmatprep.subr.mxu0 0.0
  %169 = vmatpush1.msra.mxu0 0.0
  %170 = vmatprep.subr.mxu0 0.0
  %171 = vmatpush1.msra.mxu0 0.0
  %172 = vmatprep.subr.mxu0 0.0
  %173 = vmatpush1.msra.mxu0 0.0
  %174 = vmatprep.subr.mxu0 0.0
  %175 = vmatpush1.msra.mxu0 0.0
  %176 = vmatprep.subr.mxu0 0.0
  %177 = vmatpush1.msra.mxu0 0.0
  %178 = vmatprep.subr.mxu0 0.0
  %179 = vmatpush1.msra.mxu0 0.0
  %180 = vmatprep.subr.mxu0 0.0
  %181 = vmatpush1.msra.mxu0 0.0
  %182 = vmatprep.subr.mxu0 0.0
  %183 = vmatpush1.msra.mxu0 0.0
  %184 = vmatprep.subr.mxu0 0.0
  %185 = vmatpush1.msra.mxu0 0.0
  %186 = vmatprep.subr.mxu0 0.0
  %187 = vmatpush1.msra.mxu0 0.0
  %188 = vmatprep.subr.mxu0 0.0
  %189 = vmatpush1.msra.mxu0 0.0
  %190 = vmatprep.subr.mxu0 0.0
  %191 = vmatpush1.msra.mxu0 0.0
  %192 = vmatprep.subr.mxu0 0.0
  %193 = vmatpush1.msra.mxu0 0.0
  %194 = vmatprep.subr.mxu0 0.0
  %195 = vmatpush1.msra.mxu0 0.0
  %196 = vmatprep.subr.mxu0 0.0
  %197 = vmatpush1.msra.mxu0 0.0
  %198 = vmatprep.mubr.f32.mxu0 0.0
  %199 = vmatmul.mubr.f32.gmra.mrb[0].mxu0 %v129
  %v200 = vpop.f32.mrb[0].mxu0
  %v201 = vadd.f32 %v121, %v200
  %v202 = vpop.f32.mrb[0].mxu0
  %203 = vmatprep.mubr.f32.mxu0 0.0
  %204 = vmatmul.mubr.f32.gmra.mrb[0].mxu0 %v132
  %v205 = vpop.f32.mrb[0].mxu0
  %v206 = vadd.f32 %v126, %v205
  %v207 = vpop.f32.mrb[0].mxu0
  %208 = vdwg.mxu0
  %v209 = vmax.f32 %v201, 0.0
  %v210 = vmax.f32 %v206, 0.0
  %v211 = vld [vmem:[%s1 + $0x20] sm:$0xff]
  %v212 = vld [vmem:[%s1 + $0x28] sm:$0xff]
  %v213 = vld [vmem:[%s2 + $0x20] sm:$0xff]
  %v214 = vld [vmem:[%s2 + $0x28] sm:$0xff]
  %216 = vset.pattern.permute.xlu0 0
  %217 = vperm.xlu0 %216, %v213
  %v218 = vpop.permute.xlu0 %217
  %221 = vset.pattern.permute.xlu0 0
  %222 = vperm.xlu0 %221, %v214
  %v223 = vpop.permute.xlu0 %222
  %v226 = vsel %vm30, %v211, 0
  %v229 = vsel %vm30, %v212, 0
  %231 = vmatprep.subr.mxu0 0.0
  %232 = vmatpush1.msra.mxu0 %v209
  %233 = vmatprep.subr.mxu0 0.0
  %234 = vmatpush1.msra.mxu0 %v210
  %235 = vmatprep.subr.mxu0 0.0
  %236 = vmatpush1.msra.mxu0 0.0
  %237 = vmatprep.subr.mxu0 0.0
  %238 = vmatpush1.msra.mxu0 0.0
  %239 = vmatprep.subr.mxu0 0.0
  %240 = vmatpush1.msra.mxu0 0.0
  %241 = vmatprep.subr.mxu0 0.0
  %242 = vmatpush1.msra.mxu0 0.0
  %243 = vmatprep.subr.mxu0 0.0
  %244 = vmatpush1.msra.mxu0 0.0
  %245 = vmatprep.subr.mxu0 0.0
  %246 = vmatpush1.msra.mxu0 0.0
  %247 = vmatprep.subr.mxu0 0.0
  %248 = vmatpush1.msra.mxu0 0.0
  %249 = vmatprep.subr.mxu0 0.0
  %250 = vmatpush1.msra.mxu0 0.0
  %251 = vmatprep.subr.mxu0 0.0
  %252 = vmatpush1.msra.mxu0 0.0
  %253 = vmatprep.subr.mxu0 0.0
  %254 = vmatpush1.msra.mxu0 0.0
  %255 = vmatprep.subr.mxu0 0.0
  %256 = vmatpush1.msra.mxu0 0.0
  %257 = vmatprep.subr.mxu0 0.0
  %258 = vmatpush1.msra.mxu0 0.0
  %259 = vmatprep.subr.mxu0 0.0
  %260 = vmatpush1.msra.mxu0 0.0
  %261 = vmatprep.subr.mxu0 0.0
  %262 = vmatpush1.msra.mxu0 0.0
  %263 = vmatprep.subr.mxu0 0.0
  %264 = vmatpush1.msra.mxu0 0.0
  %265 = vmatprep.subr.mxu0 0.0
  %266 = vmatpush1.msra.mxu0 0.0
  %267 = vmatprep.subr.mxu0 0.0
  %268 = vmatpush1.msra.mxu0 0.0
  %269 = vmatprep.subr.mxu0 0.0
  %270 = vmatpush1.msra.mxu0 0.0
  %271 = vmatprep.subr.mxu0 0.0
  %272 = vmatpush1.msra.mxu0 0.0
  %273 = vmatprep.subr.mxu0 0.0
  %274 = vmatpush1.msra.mxu0 0.0
  %275 = vmatprep.subr.mxu0 0.0
  %276 = vmatpush1.msra.mxu0 0.0
  %277 = vmatprep.subr.mxu0 0.0
  %278 = vmatpush1.msra.mxu0 0.0
  %279 = vmatprep.subr.mxu0 0.0
  %280 = vmatpush1.msra.mxu0 0.0
  %281 = vmatprep.subr.mxu0 0.0
  %282 = vmatpush1.msra.mxu0 0.0
  %283 = vmatprep.subr.mxu0 0.0
  %284 = vmatpush1.msra.mxu0 0.0
  %285 = vmatprep.subr.mxu0 0.0
  %286 = vmatpush1.msra.mxu0 0.0
  %287 = vmatprep.subr.mxu0 0.0
  %288 = vmatpush1.msra.mxu0 0.0
  %289 = vmatprep.subr.mxu0 0.0
  %290 = vmatpush1.msra.mxu0 0.0
  %291 = vmatprep.subr.mxu0 0.0
  %292 = vmatpush1.msra.mxu0 0.0
  %293 = vmatprep.subr.mxu0 0.0
  %294 = vmatpush1.msra.mxu0 0.0
  %295 = vmatprep.mubr.f32.mxu0 0.0
  %296 = vmatmul.mubr.f32.gmra.mrb[0].mxu0 %v226
  %v297 = vpop.f32.mrb[0].mxu0
  %v298 = vadd.f32 %v218, %v297
  %v299 = vpop.f32.mrb[0].mxu0
  %300 = vmatprep.mubr.f32.mxu0 0.0
  %301 = vmatmul.mubr.f32.gmra.mrb[0].mxu0 %v229
  %v302 = vpop.f32.mrb[0].mxu0
  %v303 = vadd.f32 %v223, %v302
  %v304 = vpop.f32.mrb[0].mxu0
  %305 = vdwg.mxu0
  %v306 = vmax.f32 %v298, 0.0
  %v307 = vmax.f32 %v303, 0.0
  %v308 = vld [vmem:[%s1 + $0x30] sm:$0xff]
  %v309 = vld [vmem:[%s1 + $0x38] sm:$0xff]
  %v310 = vld [vmem:[%s2 + $0x30] sm:$0xff]
  %v311 = vld [vmem:[%s2 + $0x38] sm:$0xff]
  %313 = vset.pattern.permute.xlu0 0
  %314 = vperm.xlu0 %313, %v310
  %v315 = vpop.permute.xlu0 %314
  %318 = vset.pattern.permute.xlu0 0
  %319 = vperm.xlu0 %318, %v311
  %v320 = vpop.permute.xlu0 %319
  %v323 = vsel %vm30, %v308, 0
  %v326 = vsel %vm30, %v309, 0
  %328 = vmatprep.subr.mxu0 0.0
  %329 = vmatpush1.msra.mxu0 %v306
  %330 = vmatprep.subr.mxu0 0.0
  %331 = vmatpush1.msra.mxu0 %v307
  %332 = vmatprep.subr.mxu0 0.0
  %333 = vmatpush1.msra.mxu0 0.0
  %334 = vmatprep.subr.mxu0 0.0
  %335 = vmatpush1.msra.mxu0 0.0
  %336 = vmatprep.subr.mxu0 0.0
  %337 = vmatpush1.msra.mxu0 0.0
  %338 = vmatprep.subr.mxu0 0.0
  %339 = vmatpush1.msra.mxu0 0.0
  %340 = vmatprep.subr.mxu0 0.0
  %341 = vmatpush1.msra.mxu0 0.0
  %342 = vmatprep.subr.mxu0 0.0
  %343 = vmatpush1.msra.mxu0 0.0
  %344 = vmatprep.subr.mxu0 0.0
  %345 = vmatpush1.msra.mxu0 0.0
  %346 = vmatprep.subr.mxu0 0.0
  %347 = vmatpush1.msra.mxu0 0.0
  %348 = vmatprep.subr.mxu0 0.0
  %349 = vmatpush1.msra.mxu0 0.0
  %350 = vmatprep.subr.mxu0 0.0
  %351 = vmatpush1.msra.mxu0 0.0
  %352 = vmatprep.subr.mxu0 0.0
  %353 = vmatpush1.msra.mxu0 0.0
  %354 = vmatprep.subr.mxu0 0.0
  %355 = vmatpush1.msra.mxu0 0.0
  %356 = vmatprep.subr.mxu0 0.0
  %357 = vmatpush1.msra.mxu0 0.0
  %358 = vmatprep.subr.mxu0 0.0
  %359 = vmatpush1.msra.mxu0 0.0
  %360 = vmatprep.subr.mxu0 0.0
  %361 = vmatpush1.msra.mxu0 0.0
  %362 = vmatprep.subr.mxu0 0.0
  %363 = vmatpush1.msra.mxu0 0.0
  %364 = vmatprep.subr.mxu0 0.0
  %365 = vmatpush1.msra.mxu0 0.0
  %366 = vmatprep.subr.mxu0 0.0
  %367 = vmatpush1.msra.mxu0 0.0
  %368 = vmatprep.subr.mxu0 0.0
  %369 = vmatpush1.msra.mxu0 0.0
  %370 = vmatprep.subr.mxu0 0.0
  %371 = vmatpush1.msra.mxu0 0.0
  %372 = vmatprep.subr.mxu0 0.0
  %373 = vmatpush1.msra.mxu0 0.0
  %374 = vmatprep.subr.mxu0 0.0
  %375 = vmatpush1.msra.mxu0 0.0
  %376 = vmatprep.subr.mxu0 0.0
  %377 = vmatpush1.msra.mxu0 0.0
  %378 = vmatprep.subr.mxu0 0.0
  %379 = vmatpush1.msra.mxu0 0.0
  %380 = vmatprep.subr.mxu0 0.0
  %381 = vmatpush1.msra.mxu0 0.0
  %382 = vmatprep.subr.mxu0 0.0
  %383 = vmatpush1.msra.mxu0 0.0
  %384 = vmatprep.subr.mxu0 0.0
  %385 = vmatpush1.msra.mxu0 0.0
  %386 = vmatprep.subr.mxu0 0.0
  %387 = vmatpush1.msra.mxu0 0.0
  %388 = vmatprep.subr.mxu0 0.0
  %389 = vmatpush1.msra.mxu0 0.0
  %390 = vmatprep.subr.mxu0 0.0
  %391 = vmatpush1.msra.mxu0 0.0
  %392 = vmatprep.mubr.f32.mxu0 0.0
  %393 = vmatmul.mubr.f32.gmra.mrb[0].mxu0 %v323
  %v394 = vpop.f32.mrb[0].mxu0
  %v395 = vadd.f32 %v315, %v394
  %v396 = vpop.f32.mrb[0].mxu0
  %397 = vmatprep.mubr.f32.mxu0 0.0
  %398 = vmatmul.mubr.f32.gmra.mrb[0].mxu0 %v326
  %v399 = vpop.f32.mrb[0].mxu0
  %v400 = vadd.f32 %v320, %v399
  %v401 = vpop.f32.mrb[0].mxu0
  %402 = vdwg.mxu0
  %v403 = vmax.f32 %v395, 0.0
  %v404 = vmax.f32 %v400, 0.0
  %v405 = vld [vmem:[%s1 + $0x40] sm:$0xff]
  %v406 = vld [vmem:[%s1 + $0x48] sm:$0xff]
  %v407 = vld [vmem:[%s2 + $0x40] sm:$0xff]
  %v408 = vld [vmem:[%s2 + $0x48] sm:$0xff]
  %410 = vset.pattern.permute.xlu0 0
  %411 = vperm.xlu0 %410, %v407
  %v412 = vpop.permute.xlu0 %411
  %415 = vset.pattern.permute.xlu0 0
  %416 = vperm.xlu0 %415, %v408
  %v417 = vpop.permute.xlu0 %416
  %v419 = vsel %vm30, %v405, 0
  %v422 = vsel %vm30, %v406, 0
  %424 = vmatprep.subr.mxu0 0.0
  %425 = vmatpush1.msra.mxu0 %v403
  %426 = vmatprep.subr.mxu0 0.0
  %427 = vmatpush1.msra.mxu0 %v404
  %428 = vmatprep.subr.mxu0 0.0
  %429 = vmatpush1.msra.mxu0 0.0
  %430 = vmatprep.subr.mxu0 0.0
  %431 = vmatpush1.msra.mxu0 0.0
  %432 = vmatprep.subr.mxu0 0.0
  %433 = vmatpush1.msra.mxu0 0.0
  %434 = vmatprep.subr.mxu0 0.0
  %435 = vmatpush1.msra.mxu0 0.0
  %436 = vmatprep.subr.mxu0 0.0
  %437 = vmatpush1.msra.mxu0 0.0
  %438 = vmatprep.subr.mxu0 0.0
  %439 = vmatpush1.msra.mxu0 0.0
  %440 = vmatprep.subr.mxu0 0.0
  %441 = vmatpush1.msra.mxu0 0.0
  %442 = vmatprep.subr.mxu0 0.0
  %443 = vmatpush1.msra.mxu0 0.0
  %444 = vmatprep.subr.mxu0 0.0
  %445 = vmatpush1.msra.mxu0 0.0
  %446 = vmatprep.subr.mxu0 0.0
  %447 = vmatpush1.msra.mxu0 0.0
  %448 = vmatprep.subr.mxu0 0.0
  %449 = vmatpush1.msra.mxu0 0.0
  %450 = vmatprep.subr.mxu0 0.0
  %451 = vmatpush1.msra.mxu0 0.0
  %452 = vmatprep.subr.mxu0 0.0
  %453 = vmatpush1.msra.mxu0 0.0
  %454 = vmatprep.subr.mxu0 0.0
  %455 = vmatpush1.msra.mxu0 0.0
  %456 = vmatprep.subr.mxu0 0.0
  %457 = vmatpush1.msra.mxu0 0.0
  %458 = vmatprep.subr.mxu0 0.0
  %459 = vmatpush1.msra.mxu0 0.0
  %460 = vmatprep.subr.mxu0 0.0
  %461 = vmatpush1.msra.mxu0 0.0
  %462 = vmatprep.subr.mxu0 0.0
  %463 = vmatpush1.msra.mxu0 0.0
  %464 = vmatprep.subr.mxu0 0.0
  %465 = vmatpush1.msra.mxu0 0.0
  %466 = vmatprep.subr.mxu0 0.0
  %467 = vmatpush1.msra.mxu0 0.0
  %468 = vmatprep.subr.mxu0 0.0
  %469 = vmatpush1.msra.mxu0 0.0
  %470 = vmatprep.subr.mxu0 0.0
  %471 = vmatpush1.msra.mxu0 0.0
  %472 = vmatprep.subr.mxu0 0.0
  %473 = vmatpush1.msra.mxu0 0.0
  %474 = vmatprep.subr.mxu0 0.0
  %475 = vmatpush1.msra.mxu0 0.0
  %476 = vmatprep.subr.mxu0 0.0
  %477 = vmatpush1.msra.mxu0 0.0
  %478 = vmatprep.subr.mxu0 0.0
  %479 = vmatpush1.msra.mxu0 0.0
  %480 = vmatprep.subr.mxu0 0.0
  %481 = vmatpush1.msra.mxu0 0.0
  %482 = vmatprep.subr.mxu0 0.0
  %483 = vmatpush1.msra.mxu0 0.0
  %484 = vmatprep.subr.mxu0 0.0
  %485 = vmatpush1.msra.mxu0 0.0
  %486 = vmatprep.subr.mxu0 0.0
  %487 = vmatpush1.msra.mxu0 0.0
  %488 = vmatprep.mubr.f32.mxu0 0.0
  %489 = vmatmul.mubr.f32.gmra.mrb[0].mxu0 %v419
  %v490 = vpop.f32.mrb[0].mxu0
  %v491 = vadd.f32 %v412, %v490
  %v492 = vpop.f32.mrb[0].mxu0
  %493 = vmatprep.mubr.f32.mxu0 0.0
  %494 = vmatmul.mubr.f32.gmra.mrb[0].mxu0 %v422
  %v495 = vpop.f32.mrb[0].mxu0
  %v496 = vpop.f32.mrb[0].mxu0
  %497 = vdwg.mxu0
  %v498 = vsub.f32 0.0, %v491
  %v499 = vmul.f32 %v498, 1.442695
  %v500 = vpow.pop %v499
  %v501 = vadd.f32 %v500, 1.0
  %v502 = vrcp.pop %v501
  %503 = vst [vmem:[%s3] sm:$0x1] %v502
  // Predicated region
  $region14: #{binary_classification_nn.1} parent=0 // pred_check
    _
  $region15: #{binary_classification_nn.1} parent=0 // pred_check_branch
    %505 = sbr.rel (0) target = $region17
  $region16: #{binary_classification_nn.1} parent=0 // pred_region
    _
  $region17: #{binary_classification_nn.1} parent=0 // pred_fallthru
    _
  // Predicated region
  $region18: #{binary_classification_nn.1} parent=0 // pred_check
    _
  $region19: #{binary_classification_nn.1} parent=0 // pred_check_branch
    %507 = sbr.rel (0) target = $region21
  $region20: #{binary_classification_nn.1} parent=0 // pred_region
    _
  $region21: #{binary_classification_nn.1} parent=0 // pred_fallthru
    _

</llo_original>
